<compile_context>
chip_gen: v5e
topology: v5e:2x2
jax: 0.10.0
libtpu: 0.0.40
codegen_flags: <defaults>
</compile_context>

<pallas_src>
import jax
import jax.numpy as jnp
from jax.experimental import pallas as pl
from jax.experimental.pallas import tpu as pltpu

OBS_SIZE = 64      # observation_space_size == hidden_size
HIDDEN = 64
ACTIONS = 4
OUT_PAD = 128      # W2^T / b2 zero-padded to a full 128-lane MXU tile
SMALL_B_MAX = 16   # gather path for B <= 16, one-hot MXU path above
LARGE_TB = 128     # batch tile for the gridded large-B path


# ----------------------------------------------------------------------------
# Small-batch kernel: row-gather layer 1 (one_hot @ W1^T == row select), no
# scratch, no grid, slice fused into the store.
# ----------------------------------------------------------------------------
def _corenet_gather_kernel(states_ref, w1_ref, b1_ref, w2_ref, b2_ref, o_ref):
    # states_ref: SMEM (B,) int32
    # w1_ref:     VMEM (OBS_SIZE, HIDDEN) f32  == W1^T ; row s == one_hot(s) @ W1^T
    # b1_ref:     VMEM (1, HIDDEN) f32
    # w2_ref:     VMEM (HIDDEN, OUT_PAD) f32   == W2^T zero-padded to 128 lanes
    # b2_ref:     VMEM (1, OUT_PAD) f32        zero-padded
    # o_ref:      VMEM (B, ACTIONS) f32
    B = o_ref.shape[0]

    # Layer 1 input: gather row `state` of W1^T for each batch element, built
    # directly in vregs (no scratch round-trip).  Clip keeps the VMEM read
    # in-bounds; the validity scale reproduces one_hot's all-zero row for
    # out-of-range states so the kernel matches the PyTorch reference exactly.
    rows = []
    for i in range(B):
        s = states_ref[i]
        valid = jnp.logical_and(s >= 0, s < OBS_SIZE).astype(jnp.float32)
        sc = jnp.clip(s, 0, OBS_SIZE - 1)
        rows.append(w1_ref[pl.ds(sc, 1), :] * valid)        # (1, HIDDEN)
    x = rows[0] if B == 1 else jnp.concatenate(rows, axis=0)  # (B, HIDDEN)

    h = jax.nn.sigmoid(x + b1_ref[...])                       # (B, HIDDEN)

    # Layer 2 on a full 128-lane MXU tile; keep only the real ACTIONS columns
    # in the store (fused slice -> no post-kernel XLA op).
    out = jnp.dot(h, w2_ref[...], preferred_element_type=jnp.float32) + b2_ref[...]
    o_ref[...] = out[:, :ACTIONS]


# ----------------------------------------------------------------------------
# Large-batch kernel: one-hot via iota compare + MXU matmul for layer 1,
# tiled over the batch with a parallel grid axis (v7x: both TensorCores).
# ----------------------------------------------------------------------------
def _corenet_onehot_kernel(states_ref, w1_ref, b1_ref, w2_ref, b2_ref, o_ref):
    # states_ref: VMEM (TB, 1) int32
    TB = o_ref.shape[0]
    iota = jax.lax.broadcasted_iota(jnp.int32, (TB, OBS_SIZE), 1)
    onehot = (iota == states_ref[...]).astype(jnp.float32)    # (TB, OBS_SIZE)
    h = jax.nn.sigmoid(
        jnp.dot(onehot, w1_ref[...], preferred_element_type=jnp.float32)
        + b1_ref[...])
    out = jnp.dot(h, w2_ref[...], preferred_element_type=jnp.float32) + b2_ref[...]
    o_ref[...] = out[:, :ACTIONS]


# ----------------------------------------------------------------------------
# Wrappers
# ----------------------------------------------------------------------------
def _forward_small(states_i32, w1_t, b1_row, w2_t_pad, b2_row_pad):
    B = states_i32.shape[0]
    return pl.pallas_call(
        _corenet_gather_kernel,
        out_shape=jax.ShapeDtypeStruct((B, ACTIONS), jnp.float32),
        in_specs=[
            pl.BlockSpec(memory_space=pltpu.MemorySpace.SMEM),   # states
            pl.BlockSpec((OBS_SIZE, HIDDEN), lambda: (0, 0)),    # W1^T
            pl.BlockSpec((1, HIDDEN), lambda: (0, 0)),           # b1 row
            pl.BlockSpec((HIDDEN, OUT_PAD), lambda: (0, 0)),     # W2^T padded
            pl.BlockSpec((1, OUT_PAD), lambda: (0, 0)),          # b2 row padded
        ],
        out_specs=pl.BlockSpec((B, ACTIONS), lambda: (0, 0)),
    )(states_i32, w1_t, b1_row, w2_t_pad, b2_row_pad)


def _forward_large(states_i32, w1_t, b1_row, w2_t_pad, b2_row_pad):
    B = states_i32.shape[0]
    states_col = states_i32.reshape(B, 1)
    tb = LARGE_TB if B >= LARGE_TB else B
    return pl.pallas_call(
        _corenet_onehot_kernel,
        out_shape=jax.ShapeDtypeStruct((B, ACTIONS), jnp.float32),
        grid=(pl.cdiv(B, tb),),
        in_specs=[
            pl.BlockSpec((tb, 1), lambda i: (i, 0)),             # states column
            pl.BlockSpec((OBS_SIZE, HIDDEN), lambda i: (0, 0)),  # W1^T
            pl.BlockSpec((1, HIDDEN), lambda i: (0, 0)),         # b1 row
            pl.BlockSpec((HIDDEN, OUT_PAD), lambda i: (0, 0)),   # W2^T padded
            pl.BlockSpec((1, OUT_PAD), lambda i: (0, 0)),        # b2 row padded
        ],
        out_specs=pl.BlockSpec((tb, ACTIONS), lambda i: (i, 0)),
        compiler_params=pltpu.CompilerParams(
            dimension_semantics=("parallel",)),
    )(states_col, w1_t, b1_row, w2_t_pad, b2_row_pad)


@jax.jit
def corenet_forward_batched(states_i32, w1_t, b1_row, w2_t_pad, b2_row_pad):
    """states_i32: (B,) int32  ->  (B, ACTIONS) f32 logits."""
    B = states_i32.shape[0]
    if B <= SMALL_B_MAX:
        return _forward_small(states_i32, w1_t, b1_row, w2_t_pad, b2_row_pad)
    return _forward_large(states_i32, w1_t, b1_row, w2_t_pad, b2_row_pad)


@jax.jit
def corenet_forward(state_i32, w1_t, b1_row, w2_t_pad, b2_row_pad):
    """Module-faithful forward: state_i32 (1,) int32 -> (ACTIONS,) f32 (== .view(-1))."""
    out = _forward_small(state_i32, w1_t, b1_row, w2_t_pad, b2_row_pad)
    return out.reshape(-1)   # (1,4)->(4,) is a bitcast inside this jit, no extra launch


# ----------------------------------------------------------------------------
# Parameters (uniform_linear_layer semantics) and plain-JAX reference
# ----------------------------------------------------------------------------
def init_params(key):
    # torch layout: weight (out, in) ~ U(0,1), bias = -0.02.  Kernel layouts
    # ((in,out) weights, 2-D bias rows, W2/b2 padded to 128 lanes) are built
    # once here, not per call.
    k1, k2 = jax.random.split(key)
    w1 = jax.random.uniform(k1, (HIDDEN, OBS_SIZE), dtype=jnp.float32)
    b1 = jnp.full((HIDDEN,), -0.02, dtype=jnp.float32)
    w2 = jax.random.uniform(k2, (ACTIONS, HIDDEN), dtype=jnp.float32)
    b2 = jnp.full((ACTIONS,), -0.02, dtype=jnp.float32)

    w1_t = w1.T                                                           # (64, 64)
    b1_row = b1.reshape(1, HIDDEN)                                        # (1, 64)
    w2_t_pad = jnp.zeros((HIDDEN, OUT_PAD), jnp.float32).at[:, :ACTIONS].set(w2.T)
    b2_row_pad = jnp.zeros((1, OUT_PAD), jnp.float32).at[:, :ACTIONS].set(b2)
    return (w1_t, b1_row, w2_t_pad, b2_row_pad), (w1, b1, w2, b2)


def reference_forward(states, w1, b1, w2, b2):
    """Plain-JAX reference with torch-layout weights. states: (B,) -> (B, ACTIONS)."""
    obs = jax.nn.one_hot(states, OBS_SIZE, dtype=jnp.float32)  # all-zero row if OOR
    h = jax.nn.sigmoid(obs @ w1.T + b1)
    return h @ w2.T + b2


if __name__ == "__main__":
    key = jax.random.PRNGKey(0)
    (w1_t, b1_row, w2_t_pad, b2_row_pad), (w1, b1, w2, b2) = init_params(key)
    params = (w1_t, b1_row, w2_t_pad, b2_row_pad)

    # --- single-state path (matches CoreNet.forward(state).view(-1)) ---
    state_i32 = jnp.array([7], dtype=jnp.int32)
    out1 = jax.block_until_ready(corenet_forward(state_i32, *params))
    ref1 = reference_forward(state_i32, w1, b1, w2, b2).reshape(-1)
    assert out1.shape == (ACTIONS,)
    assert jnp.allclose(out1, ref1, atol=1e-5, rtol=1e-5), (out1, ref1)

    # --- small batch (gather path), including out-of-range states which must
    #     reproduce one_hot's all-zero row exactly like the reference ---
    states = jnp.array([0, 7, 13, 21, 999, -3, 55, 63], dtype=jnp.int32)
    outB = jax.block_until_ready(corenet_forward_batched(states, *params))
    refB = reference_forward(states, w1, b1, w2, b2)
    assert outB.shape == (states.shape[0], ACTIONS)
    assert jnp.allclose(outB, refB, atol=1e-5, rtol=1e-5), (outB, refB)

    # --- large batch (one-hot MXU path, parallel grid over batch tiles) ---
    big_states = jax.random.randint(jax.random.PRNGKey(1), (256,), 0, OBS_SIZE,
                                    dtype=jnp.int32)
    outL = jax.block_until_ready(corenet_forward_batched(big_states, *params))
    refL = reference_forward(big_states, w1, b1, w2, b2)
    assert outL.shape == (256, ACTIONS)
    assert jnp.allclose(outL, refL, atol=1e-5, rtol=1e-5)

    print("KERNEL_OK")
</pallas_src>

<mosaic_0001>
module attributes {stable_mosaic.version = 11 : i64} {
  func.func @_corenet_gather_kernel(%arg0: memref<1xi32, #tpu.memory_space<smem>>, %arg1: memref<64x64xf32, #tpu.memory_space<vmem>>, %arg2: memref<1x64xf32, #tpu.memory_space<vmem>>, %arg3: memref<64x128xf32, #tpu.memory_space<vmem>>, %arg4: memref<1x128xf32, #tpu.memory_space<vmem>>, %arg5: memref<1x4xf32, #tpu.memory_space<vmem>>) attributes {dimension_semantics = [], scalar_prefetch = 0 : i64, scratch_operands = 0 : i64, tpu.core_type = #tpu.core_type<tc>} {
    %c0 = arith.constant 0 : index
    %0 = memref.load %arg0[%c0] : memref<1xi32, #tpu.memory_space<smem>>
    %c0_i32 = arith.constant 0 : i32
    %1 = arith.cmpi sge, %0, %c0_i32 : i32
    %c64_i32 = arith.constant 64 : i32
    %2 = arith.cmpi slt, %0, %c64_i32 : i32
    %3 = arith.andi %1, %2 : i1
    %4 = arith.extui %3 : i1 to i32
    %5 = arith.sitofp %4 : i32 to f32
    %c0_i32_0 = arith.constant 0 : i32
    %c63_i32 = arith.constant 63 : i32
    %6 = arith.maxsi %c0_i32_0, %0 : i32
    %7 = arith.minsi %c63_i32, %6 : i32
    %8 = arith.index_cast %7 : i32 to index
    %c0_1 = arith.constant 0 : index
    %9 = vector.load %arg1[%8, %c0_1] : memref<64x64xf32, #tpu.memory_space<vmem>>, vector<1x64xf32>
    %10 = vector.broadcast %5 : f32 to vector<1x64xf32>
    %11 = arith.mulf %9, %10 : vector<1x64xf32>
    %c0_2 = arith.constant 0 : index
    %c0_3 = arith.constant 0 : index
    %12 = vector.load %arg2[%c0_2, %c0_3] : memref<1x64xf32, #tpu.memory_space<vmem>>, vector<1x64xf32>
    %13 = arith.addf %11, %12 : vector<1x64xf32>
    %14 = arith.negf %13 : vector<1x64xf32>
    %15 = math.exp %14 : vector<1x64xf32>
    %cst = arith.constant 1.000000e+00 : f32
    %16 = vector.broadcast %cst : f32 to vector<1x64xf32>
    %17 = arith.addf %16, %15 : vector<1x64xf32>
    %18 = arith.divf %16, %17 : vector<1x64xf32>
    %c0_4 = arith.constant 0 : index
    %c0_5 = arith.constant 0 : index
    %19 = vector.load %arg3[%c0_4, %c0_5] : memref<64x128xf32, #tpu.memory_space<vmem>>, vector<64x128xf32>
    %cst_6 = arith.constant dense<0.000000e+00> : vector<1x128xf32>
    %20 = tpu.matmul %18, %19, %cst_6 {dimension_numbers = #tpu.dot_dimension_numbers<[1], [0], [0], [1], [0, 0, 1, 1], [], []>} : vector<1x64xf32>, vector<64x128xf32>, vector<1x128xf32> -> vector<1x128xf32>
    %c0_7 = arith.constant 0 : index
    %c0_8 = arith.constant 0 : index
    %21 = vector.load %arg4[%c0_7, %c0_8] : memref<1x128xf32, #tpu.memory_space<vmem>>, vector<1x128xf32>
    %22 = arith.addf %20, %21 : vector<1x128xf32>
    %23 = vector.extract_strided_slice %22 {offsets = [0, 0], sizes = [1, 4], strides = [1, 1]} : vector<1x128xf32> to vector<1x4xf32>
    %c0_9 = arith.constant 0 : index
    %c0_10 = arith.constant 0 : index
    %24 = vector.load %arg5[%c0_9, %c0_10] : memref<1x4xf32, #tpu.memory_space<vmem>>, vector<1x4xf32>
    tpu.vector_store %arg5[%c0_9, %c0_10], %23 {strides = array<i32>} : memref<1x4xf32, #tpu.memory_space<vmem>>, vector<1x4xf32>,
    return
  }
}

</mosaic_0001>

<llo_original>
// kernel: corenet_forward.1
$region0: #{corenet_forward.1}
  #allocation0 [shape = 'u32[]', space=smem, size = 0x4, offset = 0x4, fixed_abs, tag = 'smem constant byte address 0x4 - core index']
  #allocation1 [shape = 'u32[72,128]{1,0:T(1,128)}', space=vmem, size = 0x9000, scoped, tag = 'internal scratch']
  #allocation2 [shape = 's32[1]{0:T(128)S(6)}', space=smem, size = 0x200, scoped, tag = 'scoped memory for corenet_forward.1']
  %s0 = inlined_call_operand.<no memory space> [shape: s32[1], index: 0, kind: input, shape index: {}]
  %s1 = inlined_call_operand.hbm [shape: f32[64,64], index: 1, kind: input, shape index: {}]
  %s2 = inlined_call_operand.vmem [shape: f32[1,64], index: 2, kind: input, shape index: {}]
  %s3 = inlined_call_operand.hbm [shape: f32[64,128], index: 3, kind: input, shape index: {}]
  %s4 = inlined_call_operand.vmem [shape: f32[1,128], index: 4, kind: input, shape index: {}]
  %s5 = inlined_call_operand.hbm [shape: f32[1,4], index: 5, kind: output, shape index: {}]
  %s6 = sld [smem:[#allocation0]]
  $region38: #{corenet_forward.1} parent=0
    _
  %s8 = ssub.s32 1, %s6
  %s9 = scalar_select 0, %s8, %s6
  %10 = sst [smem:[#allocation2]] %s0
  $region1: #{corenet_forward.1} parent=0
    #allocation3 [shape = 'u8[32768]{0}', space=vmem, size = 0x8000, scoped, tag = 'input window, operand 1, single buffered']
    #allocation4 [shape = 's32[1]{0}', space=sflag, size = 0x4, scoped, tag = 'scoped memory for corenet_forward.1']
    #allocation5 [shape = 's32[1]{0}', space=sflag, size = 0x4, scoped, tag = 'scoped memory for corenet_forward.1']
    #allocation6 [shape = 'u8[32768]{0}', space=vmem, size = 0x8000, scoped, tag = 'input window, operand 3, single buffered']
    #allocation7 [shape = 's32[1]{0}', space=sflag, size = 0x4, scoped, tag = 'scoped memory for corenet_forward.1']
    #allocation8 [shape = 'u8[512]{0}', space=vmem, size = 0x400, scoped, tag = 'output window, operand 0, single buffered']
    %11 = vsyncpa [#allocation4], 0
    %12 = vsyncpa [#allocation7], 0
    %13 = vsyncpa [#allocation5], 0
    // Predicated region
    $region2: #{corenet_forward.1} parent=1 // pred_check
      _
    $region3: #{corenet_forward.1} parent=1 // pred_check_branch
      %15 = sbr.rel (0) target = $region5
    $region4: #{corenet_forward.1} parent=1 // pred_region
      _
    $region5: #{corenet_forward.1} parent=1 // pred_fallthru
      _
    // Predicated region
    $region6: #{corenet_forward.1} parent=1 // pred_check
      _
    $region7: #{corenet_forward.1} parent=1 // pred_check_branch
      %17 = sbr.rel (0) target = $region9
    $region8: #{corenet_forward.1} parent=1 // pred_region
      %19 = vsyncadd [#allocation4], 0
      %s20 = sshll.u32 %s1, 4
      %s21 = int_to_ptr.hbm [resolvable:$true] %s20
      %s22 = sshll.u32 [#allocation3], 4
      %s23 = int_to_ptr.vmem [resolvable:$true] %s22
      %28 = dma.hbm_to_vmem [thread:$0]  %s21, 1024, %s23, [#allocation4], 128, 128, 8
    $region9: #{corenet_forward.1} parent=1 // pred_fallthru
      _
    // Predicated region
    $region10: #{corenet_forward.1} parent=1 // pred_check
      _
    $region11: #{corenet_forward.1} parent=1 // pred_check_branch
      %30 = sbr.rel (0) target = $region13
    $region12: #{corenet_forward.1} parent=1 // pred_region
      _
    $region13: #{corenet_forward.1} parent=1 // pred_fallthru
      _
    // Predicated region
    $region14: #{corenet_forward.1} parent=1 // pred_check
      _
    $region15: #{corenet_forward.1} parent=1 // pred_check_branch
      %32 = sbr.rel (0) target = $region17
    $region16: #{corenet_forward.1} parent=1 // pred_region
      %34 = vsyncadd [#allocation7], 0
      %s35 = sshll.u32 %s3, 4
      %s36 = int_to_ptr.hbm [resolvable:$true] %s35
      %s37 = sshll.u32 [#allocation6], 4
      %s38 = int_to_ptr.vmem [resolvable:$true] %s37
      %43 = dma.hbm_to_vmem [thread:$0]  %s36, 1024, %s38, [#allocation7], 128, 128, 8
    $region17: #{corenet_forward.1} parent=1 // pred_fallthru
      _
    // Predicated region
    $region18: #{corenet_forward.1} parent=1 // pred_check
      _
    $region19: #{corenet_forward.1} parent=1 // pred_check_branch
      %45 = sbr.rel (0) target = $region21
    $region20: #{corenet_forward.1} parent=1 // pred_region
      _
    $region21: #{corenet_forward.1} parent=1 // pred_fallthru
      _
    // Predicated region
    $region22: #{corenet_forward.1} parent=1 // pred_check
      _
    $region23: #{corenet_forward.1} parent=1 // pred_check_branch
      %47 = sbr.rel (0) target = $region25
    $region24: #{corenet_forward.1} parent=1 // pred_region
      %49 = dma.done [#allocation4], 1024
    $region25: #{corenet_forward.1} parent=1 // pred_fallthru
      _
    // Predicated region
    $region26: #{corenet_forward.1} parent=1 // pred_check
      _
    $region27: #{corenet_forward.1} parent=1 // pred_check_branch
      %51 = sbr.rel (0) target = $region29
    $region28: #{corenet_forward.1} parent=1 // pred_region
      %53 = dma.done [#allocation7], 1024
    $region29: #{corenet_forward.1} parent=1 // pred_fallthru
      _
    %s54 = sld [smem:[#allocation2]]
    %p55 = scmp.ge.s32.totalorder %s54, 0
    %p56 = scmp.lt.s32.totalorder %s54, 64
    %p57 = pnand %p55, %p56
    %p58 = pneg %p57
    %s59 = scalar_select %p58, 1, 0
    %s60 = scvt.s32.f32 %s59
    %p61 = scmp.gt.s32.totalorder %s54, 0
    %s62 = scalar_select %p61, %s54, 0
    %p63 = scmp.lt.s32.totalorder %s62, 63
    %s64 = scalar_select %p63, %s62, 63
    %s65 = scalar_lea.vmem [#allocation3], %s64
    %v66 = vld [vmem:[%s65] sm:$0x1]
    %v67 = vstv %s60
    %v68 = vmul.f32 %v66, %v67
    %v69 = vld [vmem:[%s2] sm:$0x1]
    %v70 = vadd.f32 %v68, %v69
    %v71 = vxor.u32 %v70, 2147483648
    %v72 = vmul.f32 %v71, 1.442695
    %v73 = vpow.pop %v72
    %v74 = vadd.f32 %v73, 1.0
    %v75 = vrcp.pop %v74
    %v76 = vmul.f32 %v74, %v75
    %v77 = vsub.f32 1.0, %v76
    %v78 = vmul.f32 %v75, %v77
    %v79 = vadd.f32 %v75, %v78
    %vm80 = vweird.f32 %v74
    %vm81 = vweird.f32 %v75
    %vm82 = vmor %vm80, %vm81
    %v83 = vsel %vm82, %v75, %v79
    %v84 = vand.u32 2147483647, %v74
    %vm85 = vcmp.eq.f32.partialorder %v84, 8.507059e+37
    %v86 = vand.u32 %v74, 2147483648
    %v87 = vor.u32 1.1754944e-38, %v86
    %v88 = vsel %vm85, %v87, %v83
    %v89 = vmul.f32 1.0, %v88
    %v90 = vld [vmem:[#allocation6] sm:$0xff]
    %v91 = vld [vmem:[#allocation6 + $0x8] sm:$0xff]
    %v92 = vld [vmem:[#allocation6 + $0x10] sm:$0xff]
    %v93 = vld [vmem:[#allocation6 + $0x18] sm:$0xff]
    %v94 = vld [vmem:[#allocation6 + $0x20] sm:$0xff]
    %v95 = vld [vmem:[#allocation6 + $0x28] sm:$0xff]
    %v96 = vld [vmem:[#allocation6 + $0x30] sm:$0xff]
    %v97 = vld [vmem:[#allocation6 + $0x38] sm:$0xff]
    %v98 = vld [vmem:[%s4] sm:$0x1]
    %vm99 = vcmask 523264
    %v101 = vsel %vm99, %v89, 0
    %103 = vmatpush.msra.mxu0 0.0
    %104 = vmatpush.msra.mxu0 0.0
    %105 = vmatpush.msra.mxu0 0.0
    %106 = vmatpush.msra.mxu0 0.0
    %107 = vmatpush.msra.mxu0 0.0
    %108 = vmatpush.msra.mxu0 0.0
    %109 = vmatpush.msra.mxu0 0.0
    %110 = vmatpush.msra.mxu0 0.0
    %111 = vmatpush.msra.mxu0 %v97
    %112 = vmatpush.msra.mxu0 %v96
    %113 = vmatpush.msra.mxu0 %v95
    %114 = vmatpush.msra.mxu0 %v94
    %115 = vmatpush.msra.mxu0 %v93
    %116 = vmatpush.msra.mxu0 %v92
    %117 = vmatpush.msra.mxu0 %v91
    %118 = vmatpush.msra.mxu0 %v90
    %119 = vmatmul.f32.gmra.mxu0 %v101
    %v120 = vpop.f32.mrf.mxu0
    %v121 = vadd.f32 %v98, %v120
    %122 = vdwg.mxu0
    %vm123 = vcmask 24576
    %124 = vst.msk [vmem:[#allocation8] sm:$0x1] %vm123, %v121
    // Predicated region
    $region30: #{corenet_forward.1} parent=1 // pred_check
      _
    $region31: #{corenet_forward.1} parent=1 // pred_check_branch
      %126 = sbr.rel (0) target = $region33
    $region32: #{corenet_forward.1} parent=1 // pred_region
      %128 = vsyncadd [#allocation5], 0
      %s130 = sshll.u32 [#allocation8], 4
      %s131 = int_to_ptr.vmem [resolvable:$true] %s130
      %s132 = sshll.u32 %s5, 4
      %s133 = int_to_ptr.hbm [resolvable:$true] %s132
      %135 = dma.vmem_to_hbm [thread:$0]  %s131, 16, %s133, [#allocation5]
    $region33: #{corenet_forward.1} parent=1 // pred_fallthru
      _
    // Predicated region
    $region34: #{corenet_forward.1} parent=1 // pred_check
      _
    $region35: #{corenet_forward.1} parent=1 // pred_check_branch
      %137 = sbr.rel (0) target = $region37
    $region36: #{corenet_forward.1} parent=1 // pred_region
      %139 = dma.done [#allocation5], 16
    $region37: #{corenet_forward.1} parent=1 // pred_fallthru
      _
    %140 = vsyncpa [#allocation4], 1
    %141 = vsyncpa [#allocation7], 1
    %142 = vsyncpa [#allocation5], 1

</llo_original>
